<compile_context>
chip_gen: v5e
topology: v5e:2x2
jax: 0.10.0
libtpu: 0.0.40
codegen_flags: <defaults>
</compile_context>

<pallas_src>
import functools

import numpy as np
import jax
import jax.numpy as jnp
from jax import lax
from jax.experimental import pallas as pl
from jax.experimental.pallas import tpu as pltpu  # noqa: F401  (TPU backend)

_LANE = 128
_SUBLANE = 8


def _ceil_to(x, m):
    return -(-x // m) * m


def _textcnn_kernel(tok_ref, emb_ref, wcat_ref, scale_ref, shift_ref,
                    mask_ref, fcw_ref, fcb_ref, out_ref, *,
                    batch_p, seq_len, ks_max):
    """Fully fused TextCNN forward (eval mode), lane-dense layout.

    tok_ref:   (Rp, 1)         int32 token ids, row b*L+l; tail rows padded
                               with an id that maps to a zero embedding row
    emb_ref:   (Vp, E)         embedding table, vocab zero-padded to 128 mult
    wcat_ref:  (ks_max*E, Fp)  per-tap conv weights, feature dim padded to 128
    scale_ref: (1, Fp)         folded BN scale  = gamma / sqrt(var + eps)
    shift_ref: (1, Fp)         folded BN shift  = beta + (conv_bias - mean)*scale
    mask_ref:  (L, Fp)         1.0 where conv position p is valid for a branch
    fcw_ref:   (Fp, Cp)        FC weight (branch-major rows), zero padded
    fcb_ref:   (1, Cp)         FC bias; padded class entries = -1e30
    out_ref:   (Bp, Cp)        softmax probabilities (dense (8,128) store)
    """
    Vp = emb_ref.shape[0]
    E = emb_ref.shape[1]
    Rp = tok_ref.shape[0]
    Fp = wcat_ref.shape[1]
    R = batch_p * seq_len                      # conv rows (128 -> MXU aligned)

    # ---- embedding gather as a one-hot matmul (small vocab, VMEM table) ----
    tok = tok_ref[...]                                        # (Rp, 1) int32
    iota_v = lax.broadcasted_iota(jnp.int32, (Rp, Vp), 1)     # (Rp, Vp)
    one_hot = (tok == iota_v).astype(jnp.float32)             # (Rp, Vp)
    x_flat = jnp.dot(one_hot, emb_ref[...],
                     preferred_element_type=jnp.float32)      # (Rp, E)
    # nn.Dropout(p=0.5) on embeddings: eval mode -> identity.

    # ---- all conv branches as an unrolled per-tap matmul accumulation ----
    # Row r = b*L + p, tap t reads x_flat[r + t].  Cross-batch / padded-row
    # leakage only feeds positions that are masked below or zero-weight taps.
    acc = jnp.dot(x_flat[0:R, :], wcat_ref[0:E, :],
                  preferred_element_type=jnp.float32)         # (R, Fp)
    for t in range(1, ks_max):
        acc = acc + jnp.dot(x_flat[t:t + R, :],
                            wcat_ref[t * E:(t + 1) * E, :],
                            preferred_element_type=jnp.float32)

    # ---- folded conv-bias + BatchNorm(eval), then ReLU ----
    y = jnp.maximum(acc * scale_ref[...] + shift_ref[...], 0.0)

    # ---- mask invalid positions (post-ReLU, values >= 0) + global max-pool --
    y3 = y.reshape(batch_p, seq_len, Fp) * mask_ref[...][None, :, :]
    feats = jnp.max(y3, axis=1)                               # (Bp, Fp)
    # F.dropout(p=0.5) on features: eval mode -> identity.

    # ---- Linear + softmax(dim=1); padded class logits get bias -1e30 ----
    logits = jnp.dot(feats, fcw_ref[...],
                     preferred_element_type=jnp.float32) + fcb_ref[...]
    m = jnp.max(logits, axis=1, keepdims=True)
    e = jnp.exp(logits - m)
    denom = jnp.sum(e, axis=1, keepdims=True)
    out_ref[...] = (e * pl.reciprocal(denom, approx=True)).astype(out_ref.dtype)


def fold_params(emb_w, kernel_sizes, num_kernels, branch_params, fc_w, fc_b,
                max_length, embedding_dim, eps=1e-5):
    """One-time parameter prep: fold conv-bias+BN, pack + lane-pad weights."""
    ks_max = max(kernel_sizes)
    nb = len(kernel_sizes)
    K = num_kernels
    F = nb * K
    Fp = _ceil_to(F, _LANE)
    C = int(np.asarray(fc_w).shape[0])
    Cp = _ceil_to(C, _LANE)
    E = embedding_dim
    L = max_length

    V = int(np.asarray(emb_w).shape[0])
    Vp = _ceil_to(V, _LANE)
    emb_p = np.zeros((Vp, E), np.float32)
    emb_p[:V, :] = np.asarray(emb_w, np.float32)              # rows >= V are 0

    w_cat = np.zeros((ks_max * E, Fp), np.float32)
    scale = np.zeros((1, Fp), np.float32)
    shift = np.zeros((1, Fp), np.float32)
    mask = np.zeros((L, Fp), np.float32)
    for bi, (ks, params) in enumerate(zip(kernel_sizes, branch_params)):
        conv_w, conv_b, gamma, beta, rmean, rvar = (
            np.asarray(p, np.float32) for p in params)
        s = gamma / np.sqrt(rvar + eps)                       # (K,)
        scale[0, bi * K:(bi + 1) * K] = s
        shift[0, bi * K:(bi + 1) * K] = beta + (conv_b - rmean) * s
        # PyTorch conv weight (K, E, ks): tap t matrix is (E, K).
        for t in range(ks):
            w_cat[t * E:(t + 1) * E, bi * K:(bi + 1) * K] = conv_w[:, :, t].T
        mask[:L - ks + 1, bi * K:(bi + 1) * K] = 1.0          # valid positions

    # torch.cat(dim=2)+view feature order is k*nb + branch; our features are
    # branch-major (branch*K + k) -> permute the FC weight rows once here.
    perm = np.array([k * nb + bi for bi in range(nb) for k in range(K)])
    fcw = np.zeros((Fp, Cp), np.float32)
    fcw[:F, :C] = np.asarray(fc_w, np.float32).T[perm, :]
    fcb = np.full((1, Cp), -1e30, np.float32)                 # padded classes
    fcb[0, :C] = np.asarray(fc_b, np.float32)

    return tuple(jnp.asarray(a)
                 for a in (emb_p, w_cat, scale, shift, mask, fcw, fcb))


@functools.partial(jax.jit, static_argnames=("num_classes",))
def textcnn_forward(tokens, folded, num_classes):
    """tokens: (B, L) int token ids; folded: output of fold_params."""
    emb_p, w_cat, scale, shift, mask, fcw, fcb = folded
    B, L = tokens.shape
    Vp, E = emb_p.shape
    ks_max = w_cat.shape[0] // E
    Fp = w_cat.shape[1]
    Cp = fcw.shape[1]

    Bp = _ceil_to(B, _SUBLANE)                 # pad batch to 8 sublanes
    R = Bp * L                                 # conv rows processed in-kernel
    Rp = _ceil_to(R + ks_max - 1, _SUBLANE)    # gathered embedding rows

    # Padded rows use an id that maps to a zero row of the padded table.
    pad_id = emb_p.shape[0] - 1
    tok = jnp.pad(tokens.reshape(B * L, 1).astype(jnp.int32),
                  ((0, Rp - B * L), (0, 0)), constant_values=pad_id)

    kernel = functools.partial(_textcnn_kernel, batch_p=Bp, seq_len=L,
                               ks_max=ks_max)
    probs_p = pl.pallas_call(
        kernel,
        out_shape=jax.ShapeDtypeStruct((Bp, Cp), jnp.float32),
        in_specs=[
            pl.BlockSpec((Rp, 1), lambda: (0, 0)),
            pl.BlockSpec((Vp, E), lambda: (0, 0)),
            pl.BlockSpec((ks_max * E, Fp), lambda: (0, 0)),
            pl.BlockSpec((1, Fp), lambda: (0, 0)),
            pl.BlockSpec((1, Fp), lambda: (0, 0)),
            pl.BlockSpec((L, Fp), lambda: (0, 0)),
            pl.BlockSpec((Fp, Cp), lambda: (0, 0)),
            pl.BlockSpec((1, Cp), lambda: (0, 0)),
        ],
        out_specs=pl.BlockSpec((Bp, Cp), lambda: (0, 0)),
    )(tok, emb_p, w_cat, scale, shift, mask, fcw, fcb)

    # Slice the real (B, C) block outside the kernel (store stays lane-dense).
    return probs_p[:B, :num_classes]


def reference_forward(tokens, emb_w, kernel_sizes, branch_params, fc_w, fc_b,
                      eps=1e-5):
    """Pure-JAX reference mirroring the PyTorch module (eval mode)."""
    embed = emb_w[tokens]                                      # (B, L, E)
    L = tokens.shape[1]
    feats = []
    for ks, (cw, cb, g, be, rm, rv) in zip(kernel_sizes, branch_params):
        l_out = L - ks + 1
        z = sum(jnp.einsum('ble,ke->blk', embed[:, t:t + l_out, :], cw[:, :, t])
                for t in range(ks)) + cb
        z = (z - rm) / jnp.sqrt(rv + eps) * g + be
        z = jnp.maximum(z, 0.0)
        feats.append(jnp.max(z, axis=1))                       # (B, K)
    out = jnp.stack(feats, axis=2).reshape(tokens.shape[0], -1)
    logits = out @ fc_w.T + fc_b
    return jax.nn.softmax(logits, axis=1)


if __name__ == "__main__":
    # Small, deterministic configuration consistent with the module.
    vocab_size = 100
    embedding_dim = 32
    kernel_sizes = (3, 4, 5)
    num_kernels = 8
    num_classes = 4
    max_length = 16
    batch = 2

    key = jax.random.PRNGKey(0)
    keys = jax.random.split(key, 8)

    # "Pretrained" embedding table (synthetic, deterministic).
    emb_w = jax.random.normal(keys[0], (vocab_size, embedding_dim), jnp.float32)
    inputs = jax.random.randint(keys[1], (batch, max_length), 0, vocab_size)

    # Per-branch Conv1d + BatchNorm1d parameters (PyTorch layouts).
    branch_params = []
    for i, ks in enumerate(kernel_sizes):
        kk = jax.random.split(keys[2 + i], 6)
        conv_w = 0.1 * jax.random.normal(
            kk[0], (num_kernels, embedding_dim, ks), jnp.float32)
        conv_b = 0.1 * jax.random.normal(kk[1], (num_kernels,), jnp.float32)
        gamma = 1.0 + 0.1 * jax.random.normal(kk[2], (num_kernels,), jnp.float32)
        beta = 0.1 * jax.random.normal(kk[3], (num_kernels,), jnp.float32)
        rmean = 0.1 * jax.random.normal(kk[4], (num_kernels,), jnp.float32)
        rvar = jnp.abs(jax.random.normal(kk[5], (num_kernels,), jnp.float32)) + 0.5
        branch_params.append((conv_w, conv_b, gamma, beta, rmean, rvar))

    # Final Linear layer (PyTorch layout: (num_classes, in_features)).
    in_features = num_kernels * len(kernel_sizes)
    fc_w = 0.1 * jax.random.normal(keys[5], (num_classes, in_features), jnp.float32)
    fc_b = 0.1 * jax.random.normal(keys[6], (num_classes,), jnp.float32)

    # One-time parameter folding / padding (not on the per-forward path).
    folded = fold_params(emb_w, kernel_sizes, num_kernels, branch_params,
                         fc_w, fc_b, max_length, embedding_dim)

    probs = textcnn_forward(inputs, folded, num_classes=num_classes)
    jax.block_until_ready(probs)

    assert probs.shape == (batch, num_classes)

    ref = reference_forward(inputs, emb_w, kernel_sizes, branch_params,
                            fc_w, fc_b)
    np.testing.assert_allclose(np.asarray(probs), np.asarray(ref),
                               rtol=5e-3, atol=5e-3)
    print("KERNEL_OK")
</pallas_src>

<mosaic_0001>
module attributes {stable_mosaic.version = 11 : i64} {
  func.func @_textcnn_kernel(%arg0: memref<136x1xi32, #tpu.memory_space<vmem>>, %arg1: memref<128x32xf32, #tpu.memory_space<vmem>>, %arg2: memref<160x128xf32, #tpu.memory_space<vmem>>, %arg3: memref<1x128xf32, #tpu.memory_space<vmem>>, %arg4: memref<1x128xf32, #tpu.memory_space<vmem>>, %arg5: memref<16x128xf32, #tpu.memory_space<vmem>>, %arg6: memref<128x128xf32, #tpu.memory_space<vmem>>, %arg7: memref<1x128xf32, #tpu.memory_space<vmem>>, %arg8: memref<8x128xf32, #tpu.memory_space<vmem>>) attributes {dimension_semantics = [], scalar_prefetch = 0 : i64, scratch_operands = 0 : i64, tpu.core_type = #tpu.core_type<tc>} {
    %c0 = arith.constant 0 : index
    %c0_0 = arith.constant 0 : index
    %0 = vector.load %arg0[%c0, %c0_0] : memref<136x1xi32, #tpu.memory_space<vmem>>, vector<136x1xi32>
    %1 = tpu.iota {dimensions = array<i32: 1>} : vector<136x128xi32>
    %2 = vector.broadcast %0 : vector<136x1xi32> to vector<136x128xi32>
    %3 = arith.cmpi eq, %2, %1 : vector<136x128xi32>
    %4 = arith.extui %3 : vector<136x128xi1> to vector<136x128xi32>
    %5 = arith.sitofp %4 : vector<136x128xi32> to vector<136x128xf32>
    %c0_1 = arith.constant 0 : index
    %c0_2 = arith.constant 0 : index
    %6 = vector.load %arg1[%c0_1, %c0_2] : memref<128x32xf32, #tpu.memory_space<vmem>>, vector<128x32xf32>
    %cst = arith.constant dense<0.000000e+00> : vector<136x32xf32>
    %7 = tpu.matmul %5, %6, %cst {dimension_numbers = #tpu.dot_dimension_numbers<[1], [0], [0], [1], [0, 0, 1, 1], [], []>} : vector<136x128xf32>, vector<128x32xf32>, vector<136x32xf32> -> vector<136x32xf32>
    %8 = vector.extract_strided_slice %7 {offsets = [0, 0], sizes = [128, 32], strides = [1, 1]} : vector<136x32xf32> to vector<128x32xf32>
    %c0_3 = arith.constant 0 : index
    %c0_4 = arith.constant 0 : index
    %9 = vector.load %arg2[%c0_3, %c0_4] : memref<160x128xf32, #tpu.memory_space<vmem>>, vector<32x128xf32>
    %cst_5 = arith.constant dense<0.000000e+00> : vector<128x128xf32>
    %10 = tpu.matmul %8, %9, %cst_5 {dimension_numbers = #tpu.dot_dimension_numbers<[1], [0], [0], [1], [0, 0, 1, 1], [], []>} : vector<128x32xf32>, vector<32x128xf32>, vector<128x128xf32> -> vector<128x128xf32>
    %11 = vector.extract_strided_slice %7 {offsets = [1, 0], sizes = [128, 32], strides = [1, 1]} : vector<136x32xf32> to vector<128x32xf32>
    %c32 = arith.constant 32 : index
    %c0_6 = arith.constant 0 : index
    %12 = vector.load %arg2[%c32, %c0_6] : memref<160x128xf32, #tpu.memory_space<vmem>>, vector<32x128xf32>
    %cst_7 = arith.constant dense<0.000000e+00> : vector<128x128xf32>
    %13 = tpu.matmul %11, %12, %cst_7 {dimension_numbers = #tpu.dot_dimension_numbers<[1], [0], [0], [1], [0, 0, 1, 1], [], []>} : vector<128x32xf32>, vector<32x128xf32>, vector<128x128xf32> -> vector<128x128xf32>
    %14 = arith.addf %10, %13 : vector<128x128xf32>
    %15 = vector.extract_strided_slice %7 {offsets = [2, 0], sizes = [128, 32], strides = [1, 1]} : vector<136x32xf32> to vector<128x32xf32>
    %c64 = arith.constant 64 : index
    %c0_8 = arith.constant 0 : index
    %16 = vector.load %arg2[%c64, %c0_8] : memref<160x128xf32, #tpu.memory_space<vmem>>, vector<32x128xf32>
    %cst_9 = arith.constant dense<0.000000e+00> : vector<128x128xf32>
    %17 = tpu.matmul %15, %16, %cst_9 {dimension_numbers = #tpu.dot_dimension_numbers<[1], [0], [0], [1], [0, 0, 1, 1], [], []>} : vector<128x32xf32>, vector<32x128xf32>, vector<128x128xf32> -> vector<128x128xf32>
    %18 = arith.addf %14, %17 : vector<128x128xf32>
    %19 = vector.extract_strided_slice %7 {offsets = [3, 0], sizes = [128, 32], strides = [1, 1]} : vector<136x32xf32> to vector<128x32xf32>
    %c96 = arith.constant 96 : index
    %c0_10 = arith.constant 0 : index
    %20 = vector.load %arg2[%c96, %c0_10] : memref<160x128xf32, #tpu.memory_space<vmem>>, vector<32x128xf32>
    %cst_11 = arith.constant dense<0.000000e+00> : vector<128x128xf32>
    %21 = tpu.matmul %19, %20, %cst_11 {dimension_numbers = #tpu.dot_dimension_numbers<[1], [0], [0], [1], [0, 0, 1, 1], [], []>} : vector<128x32xf32>, vector<32x128xf32>, vector<128x128xf32> -> vector<128x128xf32>
    %22 = arith.addf %18, %21 : vector<128x128xf32>
    %23 = vector.extract_strided_slice %7 {offsets = [4, 0], sizes = [128, 32], strides = [1, 1]} : vector<136x32xf32> to vector<128x32xf32>
    %c128 = arith.constant 128 : index
    %c0_12 = arith.constant 0 : index
    %24 = vector.load %arg2[%c128, %c0_12] : memref<160x128xf32, #tpu.memory_space<vmem>>, vector<32x128xf32>
    %cst_13 = arith.constant dense<0.000000e+00> : vector<128x128xf32>
    %25 = tpu.matmul %23, %24, %cst_13 {dimension_numbers = #tpu.dot_dimension_numbers<[1], [0], [0], [1], [0, 0, 1, 1], [], []>} : vector<128x32xf32>, vector<32x128xf32>, vector<128x128xf32> -> vector<128x128xf32>
    %26 = arith.addf %22, %25 : vector<128x128xf32>
    %c0_14 = arith.constant 0 : index
    %c0_15 = arith.constant 0 : index
    %27 = vector.load %arg3[%c0_14, %c0_15] : memref<1x128xf32, #tpu.memory_space<vmem>>, vector<1x128xf32>
    %28 = vector.broadcast %27 : vector<1x128xf32> to vector<128x128xf32>
    %29 = arith.mulf %26, %28 : vector<128x128xf32>
    %c0_16 = arith.constant 0 : index
    %c0_17 = arith.constant 0 : index
    %30 = vector.load %arg4[%c0_16, %c0_17] : memref<1x128xf32, #tpu.memory_space<vmem>>, vector<1x128xf32>
    %31 = vector.broadcast %30 : vector<1x128xf32> to vector<128x128xf32>
    %32 = arith.addf %29, %31 : vector<128x128xf32>
    %cst_18 = arith.constant 0.000000e+00 : f32
    %33 = vector.broadcast %cst_18 : f32 to vector<128x128xf32>
    %34 = arith.maximumf %32, %33 : vector<128x128xf32>
    %35 = vector.shape_cast %34 : vector<128x128xf32> to vector<8x16x128xf32>
    %c0_19 = arith.constant 0 : index
    %c0_20 = arith.constant 0 : index
    %36 = vector.load %arg5[%c0_19, %c0_20] : memref<16x128xf32, #tpu.memory_space<vmem>>, vector<16x128xf32>
    %37 = vector.shape_cast %36 : vector<16x128xf32> to vector<1x16x128xf32>
    %38 = vector.broadcast %37 : vector<1x16x128xf32> to vector<8x16x128xf32>
    %39 = arith.mulf %35, %38 : vector<8x16x128xf32>
    %cst_21 = arith.constant dense<0xFF800000> : vector<8x128xf32>
    %40 = vector.multi_reduction <maximumf>, %39, %cst_21 [1] : vector<8x16x128xf32> to vector<8x128xf32>
    %c0_22 = arith.constant 0 : index
    %c0_23 = arith.constant 0 : index
    %41 = vector.load %arg6[%c0_22, %c0_23] : memref<128x128xf32, #tpu.memory_space<vmem>>, vector<128x128xf32>
    %cst_24 = arith.constant dense<0.000000e+00> : vector<8x128xf32>
    %42 = tpu.matmul %40, %41, %cst_24 {dimension_numbers = #tpu.dot_dimension_numbers<[1], [0], [0], [1], [0, 0, 1, 1], [], []>} : vector<8x128xf32>, vector<128x128xf32>, vector<8x128xf32> -> vector<8x128xf32>
    %c0_25 = arith.constant 0 : index
    %c0_26 = arith.constant 0 : index
    %43 = vector.load %arg7[%c0_25, %c0_26] : memref<1x128xf32, #tpu.memory_space<vmem>>, vector<1x128xf32>
    %44 = vector.broadcast %43 : vector<1x128xf32> to vector<8x128xf32>
    %45 = arith.addf %42, %44 : vector<8x128xf32>
    %cst_27 = arith.constant dense<0xFF800000> : vector<8xf32>
    %46 = vector.multi_reduction <maximumf>, %45, %cst_27 [1] : vector<8x128xf32> to vector<8xf32>
    %47 = vector.shape_cast %46 : vector<8xf32> to vector<8x1xf32>
    %48 = vector.broadcast %47 : vector<8x1xf32> to vector<8x128xf32>
    %49 = arith.subf %45, %48 : vector<8x128xf32>
    %50 = math.exp %49 : vector<8x128xf32>
    %cst_28 = arith.constant dense<0.000000e+00> : vector<8xf32>
    %51 = vector.multi_reduction <add>, %50, %cst_28 [1] : vector<8x128xf32> to vector<8xf32>
    %52 = vector.shape_cast %51 : vector<8xf32> to vector<8x1xf32>
    %53 = tpu.reciprocal %52 {approx = true} : vector<8x1xf32> -> vector<8x1xf32>
    %54 = vector.broadcast %53 : vector<8x1xf32> to vector<8x128xf32>
    %55 = arith.mulf %50, %54 : vector<8x128xf32>
    %c0_29 = arith.constant 0 : index
    %c0_30 = arith.constant 0 : index
    %56 = vector.load %arg8[%c0_29, %c0_30] : memref<8x128xf32, #tpu.memory_space<vmem>>, vector<8x128xf32>
    tpu.vector_store %arg8[%c0_29, %c0_30], %55 {strides = array<i32>} : memref<8x128xf32, #tpu.memory_space<vmem>>, vector<8x128xf32>,
    return
  }
}

</mosaic_0001>

<llo_original>
// kernel: textcnn_forward.1
$region0: #{textcnn_forward.1}
  #allocation0 [shape = 'u32[]', space=smem, size = 0x4, offset = 0x4, fixed_abs, tag = 'smem constant byte address 0x4 - core index']
  #allocation1 [shape = 'u32[72,128]{1,0:T(1,128)}', space=vmem, size = 0x9000, scoped, tag = 'internal scratch']
  %s0 = inlined_call_operand.vmem [shape: s32[136,1], index: 0, kind: input, shape index: {}]
  %s1 = inlined_call_operand.vmem [shape: f32[128,32], index: 1, kind: input, shape index: {}]
  %s2 = inlined_call_operand.vmem [shape: f32[160,128], index: 2, kind: input, shape index: {}]
  %s3 = inlined_call_operand.vmem [shape: f32[1,128], index: 3, kind: input, shape index: {}]
  %s4 = inlined_call_operand.vmem [shape: f32[1,128], index: 4, kind: input, shape index: {}]
  %s5 = inlined_call_operand.vmem [shape: f32[16,128], index: 5, kind: input, shape index: {}]
  %s6 = inlined_call_operand.vmem [shape: f32[128,128], index: 6, kind: input, shape index: {}]
  %s7 = inlined_call_operand.vmem [shape: f32[1,128], index: 7, kind: input, shape index: {}]
  %s8 = inlined_call_operand.vmem [shape: f32[8,128], index: 8, kind: output, shape index: {}]
  %s9 = sld [smem:[#allocation0]]
  $region42: #{textcnn_forward.1} parent=0
    _
  %s11 = ssub.s32 1, %s9
  %s12 = scalar_select 0, %s11, %s9
  // Predicated region
  $region2: #{textcnn_forward.1} parent=0 // pred_check
    _
  $region3: #{textcnn_forward.1} parent=0 // pred_check_branch
    %14 = sbr.rel (0) target = $region5
  $region4: #{textcnn_forward.1} parent=0 // pred_region
    _
  $region5: #{textcnn_forward.1} parent=0 // pred_fallthru
    _
  // Predicated region
  $region6: #{textcnn_forward.1} parent=0 // pred_check
    _
  $region7: #{textcnn_forward.1} parent=0 // pred_check_branch
    %16 = sbr.rel (0) target = $region9
  $region8: #{textcnn_forward.1} parent=0 // pred_region
    _
  $region9: #{textcnn_forward.1} parent=0 // pred_fallthru
    _
  // Predicated region
  $region10: #{textcnn_forward.1} parent=0 // pred_check
    _
  $region11: #{textcnn_forward.1} parent=0 // pred_check_branch
    %18 = sbr.rel (0) target = $region13
  $region12: #{textcnn_forward.1} parent=0 // pred_region
    _
  $region13: #{textcnn_forward.1} parent=0 // pred_fallthru
    _
  // Predicated region
  $region14: #{textcnn_forward.1} parent=0 // pred_check
    _
  $region15: #{textcnn_forward.1} parent=0 // pred_check_branch
    %20 = sbr.rel (0) target = $region17
  $region16: #{textcnn_forward.1} parent=0 // pred_region
    _
  $region17: #{textcnn_forward.1} parent=0 // pred_fallthru
    _
  // Predicated region
  $region18: #{textcnn_forward.1} parent=0 // pred_check
    _
  $region19: #{textcnn_forward.1} parent=0 // pred_check_branch
    %22 = sbr.rel (0) target = $region21
  $region20: #{textcnn_forward.1} parent=0 // pred_region
    _
  $region21: #{textcnn_forward.1} parent=0 // pred_fallthru
    _
  // Predicated region
  $region22: #{textcnn_forward.1} parent=0 // pred_check
    _
  $region23: #{textcnn_forward.1} parent=0 // pred_check_branch
    %24 = sbr.rel (0) target = $region25
  $region24: #{textcnn_forward.1} parent=0 // pred_region
    _
  $region25: #{textcnn_forward.1} parent=0 // pred_fallthru
    _
  // Predicated region
  $region26: #{textcnn_forward.1} parent=0 // pred_check
    _
  $region27: #{textcnn_forward.1} parent=0 // pred_check_branch
    %26 = sbr.rel (0) target = $region29
  $region28: #{textcnn_forward.1} parent=0 // pred_region
    _
  $region29: #{textcnn_forward.1} parent=0 // pred_fallthru
    _
  // Predicated region
  $region30: #{textcnn_forward.1} parent=0 // pred_check
    _
  $region31: #{textcnn_forward.1} parent=0 // pred_check_branch
    %28 = sbr.rel (0) target = $region33
  $region32: #{textcnn_forward.1} parent=0 // pred_region
    _
  $region33: #{textcnn_forward.1} parent=0 // pred_fallthru
    _
  %v29 = vld [vmem:[%s0] sm:$0xff]
  %v30 = vld [vmem:[%s0 + $0x8] sm:$0xff]
  %v31 = vld [vmem:[%s0 + $0x10] sm:$0xff]
  %v32 = vld [vmem:[%s0 + $0x18] sm:$0xff]
  %v33 = vld [vmem:[%s0 + $0x20] sm:$0xff]
  %v34 = vld [vmem:[%s0 + $0x28] sm:$0xff]
  %v35 = vld [vmem:[%s0 + $0x30] sm:$0xff]
  %v36 = vld [vmem:[%s0 + $0x38] sm:$0xff]
  %v37 = vld [vmem:[%s0 + $0x40] sm:$0xff]
  %v38 = vld [vmem:[%s0 + $0x48] sm:$0xff]
  %v39 = vld [vmem:[%s0 + $0x50] sm:$0xff]
  %v40 = vld [vmem:[%s0 + $0x58] sm:$0xff]
  %v41 = vld [vmem:[%s0 + $0x60] sm:$0xff]
  %v42 = vld [vmem:[%s0 + $0x68] sm:$0xff]
  %v43 = vld [vmem:[%s0 + $0x70] sm:$0xff]
  %v44 = vld [vmem:[%s0 + $0x78] sm:$0xff]
  %v45 = vld [vmem:[%s0 + $0x80] sm:$0xff]
  %v46 = vlaneseq
  %v47 = vand.u32 %v46, 127
  %48 = vset.pattern.permute.xlu0 0
  %49 = vperm.xlu0 %48, %v29
  %v50 = vpop.permute.xlu0 %49
  %51 = vset.pattern.permute.xlu0 0
  %52 = vperm.xlu0 %51, %v30
  %v53 = vpop.permute.xlu0 %52
  %54 = vset.pattern.permute.xlu0 0
  %55 = vperm.xlu0 %54, %v31
  %v56 = vpop.permute.xlu0 %55
  %57 = vset.pattern.permute.xlu0 0
  %58 = vperm.xlu0 %57, %v32
  %v59 = vpop.permute.xlu0 %58
  %60 = vset.pattern.permute.xlu0 0
  %61 = vperm.xlu0 %60, %v33
  %v62 = vpop.permute.xlu0 %61
  %63 = vset.pattern.permute.xlu0 0
  %64 = vperm.xlu0 %63, %v34
  %v65 = vpop.permute.xlu0 %64
  %66 = vset.pattern.permute.xlu0 0
  %67 = vperm.xlu0 %66, %v35
  %v68 = vpop.permute.xlu0 %67
  %69 = vset.pattern.permute.xlu0 0
  %70 = vperm.xlu0 %69, %v36
  %v71 = vpop.permute.xlu0 %70
  %72 = vset.pattern.permute.xlu0 0
  %73 = vperm.xlu0 %72, %v37
  %v74 = vpop.permute.xlu0 %73
  %75 = vset.pattern.permute.xlu0 0
  %76 = vperm.xlu0 %75, %v38
  %v77 = vpop.permute.xlu0 %76
  %78 = vset.pattern.permute.xlu0 0
  %79 = vperm.xlu0 %78, %v39
  %v80 = vpop.permute.xlu0 %79
  %81 = vset.pattern.permute.xlu0 0
  %82 = vperm.xlu0 %81, %v40
  %v83 = vpop.permute.xlu0 %82
  %84 = vset.pattern.permute.xlu0 0
  %85 = vperm.xlu0 %84, %v41
  %v86 = vpop.permute.xlu0 %85
  %87 = vset.pattern.permute.xlu0 0
  %88 = vperm.xlu0 %87, %v42
  %v89 = vpop.permute.xlu0 %88
  %90 = vset.pattern.permute.xlu0 0
  %91 = vperm.xlu0 %90, %v43
  %v92 = vpop.permute.xlu0 %91
  %93 = vset.pattern.permute.xlu0 0
  %94 = vperm.xlu0 %93, %v44
  %v95 = vpop.permute.xlu0 %94
  %96 = vset.pattern.permute.xlu0 0
  %97 = vperm.xlu0 %96, %v45
  %v98 = vpop.permute.xlu0 %97
  %vm99 = vcmp.eq.s32.totalorder %v50, %v47
  %vm100 = vcmp.eq.s32.totalorder %v53, %v47
  %vm101 = vcmp.eq.s32.totalorder %v56, %v47
  %vm102 = vcmp.eq.s32.totalorder %v59, %v47
  %vm103 = vcmp.eq.s32.totalorder %v62, %v47
  %vm104 = vcmp.eq.s32.totalorder %v65, %v47
  %vm105 = vcmp.eq.s32.totalorder %v68, %v47
  %vm106 = vcmp.eq.s32.totalorder %v71, %v47
  %vm107 = vcmp.eq.s32.totalorder %v74, %v47
  %vm108 = vcmp.eq.s32.totalorder %v77, %v47
  %vm109 = vcmp.eq.s32.totalorder %v80, %v47
  %vm110 = vcmp.eq.s32.totalorder %v83, %v47
  %vm111 = vcmp.eq.s32.totalorder %v86, %v47
  %vm112 = vcmp.eq.s32.totalorder %v89, %v47
  %vm113 = vcmp.eq.s32.totalorder %v92, %v47
  %vm114 = vcmp.eq.s32.totalorder %v95, %v47
  %vm115 = vcmp.eq.s32.totalorder %v98, %v47
  %v116 = vsel %vm99, 1, 0
  %v117 = vsel %vm100, 1, 0
  %v118 = vsel %vm101, 1, 0
  %v119 = vsel %vm102, 1, 0
  %v120 = vsel %vm103, 1, 0
  %v121 = vsel %vm104, 1, 0
  %v122 = vsel %vm105, 1, 0
  %v123 = vsel %vm106, 1, 0
  %v124 = vsel %vm107, 1, 0
  %v125 = vsel %vm108, 1, 0
  %v126 = vsel %vm109, 1, 0
  %v127 = vsel %vm110, 1, 0
  %v128 = vsel %vm111, 1, 0
  %v129 = vsel %vm112, 1, 0
  %v130 = vsel %vm113, 1, 0
  %v131 = vsel %vm114, 1, 0
  %v132 = vsel %vm115, 1, 0
  %v133 = vcvt.s32.f32 %v116
  %v134 = vcvt.s32.f32 %v117
  %v135 = vcvt.s32.f32 %v118
  %v136 = vcvt.s32.f32 %v119
  %v137 = vcvt.s32.f32 %v120
  %v138 = vcvt.s32.f32 %v121
  %v139 = vcvt.s32.f32 %v122
  %v140 = vcvt.s32.f32 %v123
  %v141 = vcvt.s32.f32 %v124
  %v142 = vcvt.s32.f32 %v125
  %v143 = vcvt.s32.f32 %v126
  %v144 = vcvt.s32.f32 %v127
  %v145 = vcvt.s32.f32 %v128
  %v146 = vcvt.s32.f32 %v129
  %v147 = vcvt.s32.f32 %v130
  %v148 = vcvt.s32.f32 %v131
  %v149 = vcvt.s32.f32 %v132
  %v150 = vld [vmem:[%s1] sm:$0xff]
  %v151 = vld [vmem:[%s1 + $0x8] sm:$0xff]
  %v152 = vld [vmem:[%s1 + $0x10] sm:$0xff]
  %v153 = vld [vmem:[%s1 + $0x18] sm:$0xff]
  %v154 = vld [vmem:[%s1 + $0x20] sm:$0xff]
  %v155 = vld [vmem:[%s1 + $0x28] sm:$0xff]
  %v156 = vld [vmem:[%s1 + $0x30] sm:$0xff]
  %v157 = vld [vmem:[%s1 + $0x38] sm:$0xff]
  %v158 = vld [vmem:[%s1 + $0x40] sm:$0xff]
  %v159 = vld [vmem:[%s1 + $0x48] sm:$0xff]
  %v160 = vld [vmem:[%s1 + $0x50] sm:$0xff]
  %v161 = vld [vmem:[%s1 + $0x58] sm:$0xff]
  %v162 = vld [vmem:[%s1 + $0x60] sm:$0xff]
  %v163 = vld [vmem:[%s1 + $0x68] sm:$0xff]
  %v164 = vld [vmem:[%s1 + $0x70] sm:$0xff]
  %v165 = vld [vmem:[%s1 + $0x78] sm:$0xff]
  %166 = vmatpush.msra.mxu0 %v165
  %167 = vmatpush.msra.mxu0 %v164
  %168 = vmatpush.msra.mxu0 %v163
  %169 = vmatpush.msra.mxu0 %v162
  %170 = vmatpush.msra.mxu0 %v161
  %171 = vmatpush.msra.mxu0 %v160
  %172 = vmatpush.msra.mxu0 %v159
  %173 = vmatpush.msra.mxu0 %v158
  %174 = vmatpush.msra.mxu0 %v157
  %175 = vmatpush.msra.mxu0 %v156
  %176 = vmatpush.msra.mxu0 %v155
  %177 = vmatpush.msra.mxu0 %v154
  %178 = vmatpush.msra.mxu0 %v153
  %179 = vmatpush.msra.mxu0 %v152
  %180 = vmatpush.msra.mxu0 %v151
  %181 = vmatpush.msra.mxu0 %v150
  %182 = vmatmul.f32.gmra.mxu0 %v133
  %v183 = vpop.f32.mrf.mxu0
  %v184 = vadd.f32 0.0, %v183
  %185 = vmatmul.f32.gmra.mxu0 %v134
  %v186 = vpop.f32.mrf.mxu0
  %v187 = vadd.f32 0.0, %v186
  %188 = vmatmul.f32.gmra.mxu0 %v135
  %v189 = vpop.f32.mrf.mxu0
  %v190 = vadd.f32 0.0, %v189
  %191 = vmatmul.f32.gmra.mxu0 %v136
  %v192 = vpop.f32.mrf.mxu0
  %v193 = vadd.f32 0.0, %v192
  %194 = vmatmul.f32.gmra.mxu0 %v137
  %v195 = vpop.f32.mrf.mxu0
  %v196 = vadd.f32 0.0, %v195
  %197 = vmatmul.f32.gmra.mxu0 %v138
  %v198 = vpop.f32.mrf.mxu0
  %v199 = vadd.f32 0.0, %v198
  %200 = vmatmul.f32.gmra.mxu0 %v139
  %v201 = vpop.f32.mrf.mxu0
  %v202 = vadd.f32 0.0, %v201
  %203 = vmatmul.f32.gmra.mxu0 %v140
  %v204 = vpop.f32.mrf.mxu0
  %v205 = vadd.f32 0.0, %v204
  %206 = vmatmul.f32.gmra.mxu0 %v141
  %v207 = vpop.f32.mrf.mxu0
  %v208 = vadd.f32 0.0, %v207
  %209 = vmatmul.f32.gmra.mxu0 %v142
  %v210 = vpop.f32.mrf.mxu0
  %v211 = vadd.f32 0.0, %v210
  %212 = vmatmul.f32.gmra.mxu0 %v143
  %v213 = vpop.f32.mrf.mxu0
  %v214 = vadd.f32 0.0, %v213
  %215 = vmatmul.f32.gmra.mxu0 %v144
  %v216 = vpop.f32.mrf.mxu0
  %v217 = vadd.f32 0.0, %v216
  %218 = vmatmul.f32.gmra.mxu0 %v145
  %v219 = vpop.f32.mrf.mxu0
  %v220 = vadd.f32 0.0, %v219
  %221 = vmatmul.f32.gmra.mxu0 %v146
  %v222 = vpop.f32.mrf.mxu0
  %v223 = vadd.f32 0.0, %v222
  %224 = vmatmul.f32.gmra.mxu0 %v147
  %v225 = vpop.f32.mrf.mxu0
  %v226 = vadd.f32 0.0, %v225
  %227 = vmatmul.f32.gmra.mxu0 %v148
  %v228 = vpop.f32.mrf.mxu0
  %v229 = vadd.f32 0.0, %v228
  %230 = vmatmul.f32.gmra.mxu0 %v149
  %v231 = vpop.f32.mrf.mxu0
  %v232 = vadd.f32 0.0, %v231
  %233 = vdwg.mxu0
  %v234 = vld [vmem:[%s2] sm:$0xff]
  %v235 = vld [vmem:[%s2 + $0x8] sm:$0xff]
  %v236 = vld [vmem:[%s2 + $0x10] sm:$0xff]
  %v237 = vld [vmem:[%s2 + $0x18] sm:$0xff]
  %v238 = vld [vmem:[%s2 + $0x20] sm:$0xff]
  %v239 = vld [vmem:[%s2 + $0x28] sm:$0xff]
  %v240 = vld [vmem:[%s2 + $0x30] sm:$0xff]
  %v241 = vld [vmem:[%s2 + $0x38] sm:$0xff]
  %vm259 = vcmask 1046528
  %v260 = vrot.slane %v184, 1
  %v261 = vrot.slane %v187, 1
  %v262 = vsel %vm259, %v260, %v261
  %v263 = vrot.slane %v190, 1
  %v264 = vsel %vm259, %v261, %v263
  %v265 = vrot.slane %v193, 1
  %v266 = vsel %vm259, %v263, %v265
  %v267 = vrot.slane %v196, 1
  %v268 = vsel %vm259, %v265, %v267
  %v269 = vrot.slane %v199, 1
  %v270 = vsel %vm259, %v267, %v269
  %v271 = vrot.slane %v202, 1
  %v272 = vsel %vm259, %v269, %v271
  %v273 = vrot.slane %v205, 1
  %v274 = vsel %vm259, %v271, %v273
  %v275 = vrot.slane %v208, 1
  %v276 = vsel %vm259, %v273, %v275
  %v277 = vrot.slane %v211, 1
  %v278 = vsel %vm259, %v275, %v277
  %v279 = vrot.slane %v214, 1
  %v280 = vsel %vm259, %v277, %v279
  %v281 = vrot.slane %v217, 1
  %v282 = vsel %vm259, %v279, %v281
  %v283 = vrot.slane %v220, 1
  %v284 = vsel %vm259, %v281, %v283
  %v285 = vrot.slane %v223, 1
  %v286 = vsel %vm259, %v283, %v285
  %v287 = vrot.slane %v226, 1
  %v288 = vsel %vm259, %v285, %v287
  %v289 = vrot.slane %v229, 1
  %v290 = vsel %vm259, %v287, %v289
  %v291 = vrot.slane %v232, 1
  %v292 = vsel %vm259, %v289, %v291
  %vm293 = vcmask 261120
  %v294 = vsel %vm293, %v262, 0
  %v296 = vsel %vm293, %v264, 0
  %v298 = vsel %vm293, %v266, 0
  %v300 = vsel %vm293, %v268, 0
  %v302 = vsel %vm293, %v270, 0
  %v304 = vsel %vm293, %v272, 0
  %v306 = vsel %vm293, %v274, 0
  %v308 = vsel %vm293, %v276, 0
  %v310 = vsel %vm293, %v278, 0
  %v312 = vsel %vm293, %v280, 0
  %v314 = vsel %vm293, %v282, 0
  %v316 = vsel %vm293, %v284, 0
  %v318 = vsel %vm293, %v286, 0
  %v320 = vsel %vm293, %v288, 0
  %v322 = vsel %vm293, %v290, 0
  %v324 = vsel %vm293, %v292, 0
  %326 = vmatpush.msra.mxu0 0.0
  %327 = vmatpush.msra.mxu0 0.0
  %328 = vmatpush.msra.mxu0 0.0
  %329 = vmatpush.msra.mxu0 0.0
  %330 = vmatpush.msra.mxu0 0.0
  %331 = vmatpush.msra.mxu0 0.0
  %332 = vmatpush.msra.mxu0 0.0
  %333 = vmatpush.msra.mxu0 0.0
  %334 = vmatpush.msra.mxu0 0.0
  %335 = vmatpush.msra.mxu0 0.0
  %336 = vmatpush.msra.mxu0 0.0
  %337 = vmatpush.msra.mxu0 0.0
  %338 = vmatpush.msra.mxu0 %v241
  %339 = vmatpush.msra.mxu0 %v240
  %340 = vmatpush.msra.mxu0 %v239
  %341 = vmatpush.msra.mxu0 %v238
  %342 = vmatmul.f32.gmra.mxu0 %v294
  %v343 = vpop.f32.mrf.mxu0
  %v344 = vadd.f32 0.0, %v343
  %345 = vmatmul.f32.gmra.mxu0 %v296
  %v346 = vpop.f32.mrf.mxu0
  %v347 = vadd.f32 0.0, %v346
  %348 = vmatmul.f32.gmra.mxu0 %v298
  %v349 = vpop.f32.mrf.mxu0
  %v350 = vadd.f32 0.0, %v349
  %351 = vmatmul.f32.gmra.mxu0 %v300
  %v352 = vpop.f32.mrf.mxu0
  %v353 = vadd.f32 0.0, %v352
  %354 = vmatmul.f32.gmra.mxu0 %v302
  %v355 = vpop.f32.mrf.mxu0
  %v356 = vadd.f32 0.0, %v355
  %357 = vmatmul.f32.gmra.mxu0 %v304
  %v358 = vpop.f32.mrf.mxu0
  %v359 = vadd.f32 0.0, %v358
  %360 = vmatmul.f32.gmra.mxu0 %v306
  %v361 = vpop.f32.mrf.mxu0
  %v362 = vadd.f32 0.0, %v361
  %363 = vmatmul.f32.gmra.mxu0 %v308
  %v364 = vpop.f32.mrf.mxu0
  %v365 = vadd.f32 0.0, %v364
  %366 = vmatmul.f32.gmra.mxu0 %v310
  %v367 = vpop.f32.mrf.mxu0
  %v368 = vadd.f32 0.0, %v367
  %369 = vmatmul.f32.gmra.mxu0 %v312
  %v370 = vpop.f32.mrf.mxu0
  %v371 = vadd.f32 0.0, %v370
  %372 = vmatmul.f32.gmra.mxu0 %v314
  %v373 = vpop.f32.mrf.mxu0
  %v374 = vadd.f32 0.0, %v373
  %375 = vmatmul.f32.gmra.mxu0 %v316
  %v376 = vpop.f32.mrf.mxu0
  %v377 = vadd.f32 0.0, %v376
  %378 = vmatmul.f32.gmra.mxu0 %v318
  %v379 = vpop.f32.mrf.mxu0
  %v380 = vadd.f32 0.0, %v379
  %381 = vmatmul.f32.gmra.mxu0 %v320
  %v382 = vpop.f32.mrf.mxu0
  %v383 = vadd.f32 0.0, %v382
  %384 = vmatmul.f32.gmra.mxu0 %v322
  %v385 = vpop.f32.mrf.mxu0
  %v386 = vadd.f32 0.0, %v385
  %387 = vmatmul.f32.gmra.mxu0 %v324
  %v388 = vpop.f32.mrf.mxu0
  %v389 = vadd.f32 0.0, %v388
  %390 = vdwg.mxu0
  %v391 = vsel %vm293, %v184, 0
  %v393 = vsel %vm293, %v187, 0
  %v395 = vsel %vm293, %v190, 0
  %v397 = vsel %vm293, %v193, 0
  %v399 = vsel %vm293, %v196, 0
  %v401 = vsel %vm293, %v199, 0
  %v403 = vsel %vm293, %v202, 0
  %v405 = vsel %vm293, %v205, 0
  %v407 = vsel %vm293, %v208, 0
  %v409 = vsel %vm293, %v211, 0
  %v411 = vsel %vm293, %v214, 0
  %v413 = vsel %vm293, %v217, 0
  %v415 = vsel %vm293, %v220, 0
  %v417 = vsel %vm293, %v223, 0
  %v419 = vsel %vm293, %v226, 0
  %v421 = vsel %vm293, %v229, 0
  %423 = vmatpush.msra.mxu0 0.0
  %424 = vmatpush.msra.mxu0 0.0
  %425 = vmatpush.msra.mxu0 0.0
  %426 = vmatpush.msra.mxu0 0.0
  %427 = vmatpush.msra.mxu0 0.0
  %428 = vmatpush.msra.mxu0 0.0
  %429 = vmatpush.msra.mxu0 0.0
  %430 = vmatpush.msra.mxu0 0.0
  %431 = vmatpush.msra.mxu0 0.0
  %432 = vmatpush.msra.mxu0 0.0
  %433 = vmatpush.msra.mxu0 0.0
  %434 = vmatpush.msra.mxu0 0.0
  %435 = vmatpush.msra.mxu0 %v237
  %436 = vmatpush.msra.mxu0 %v236
  %437 = vmatpush.msra.mxu0 %v235
  %438 = vmatpush.msra.mxu0 %v234
  %439 = vmatmul.f32.gmra.mxu0 %v391
  %v440 = vpop.f32.mrf.mxu0
  %v441 = vadd.f32 %v344, %v440
  %442 = vmatmul.f32.gmra.mxu0 %v393
  %v443 = vpop.f32.mrf.mxu0
  %v444 = vadd.f32 %v347, %v443
  %445 = vmatmul.f32.gmra.mxu0 %v395
  %v446 = vpop.f32.mrf.mxu0
  %v447 = vadd.f32 %v350, %v446
  %448 = vmatmul.f32.gmra.mxu0 %v397
  %v449 = vpop.f32.mrf.mxu0
  %v450 = vadd.f32 %v353, %v449
  %451 = vmatmul.f32.gmra.mxu0 %v399
  %v452 = vpop.f32.mrf.mxu0
  %v453 = vadd.f32 %v356, %v452
  %454 = vmatmul.f32.gmra.mxu0 %v401
  %v455 = vpop.f32.mrf.mxu0
  %v456 = vadd.f32 %v359, %v455
  %457 = vmatmul.f32.gmra.mxu0 %v403
  %v458 = vpop.f32.mrf.mxu0
  %v459 = vadd.f32 %v362, %v458
  %460 = vmatmul.f32.gmra.mxu0 %v405
  %v461 = vpop.f32.mrf.mxu0
  %v462 = vadd.f32 %v365, %v461
  %463 = vmatmul.f32.gmra.mxu0 %v407
  %v464 = vpop.f32.mrf.mxu0
  %v465 = vadd.f32 %v368, %v464
  %466 = vmatmul.f32.gmra.mxu0 %v409
  %v467 = vpop.f32.mrf.mxu0
  %v468 = vadd.f32 %v371, %v467
  %469 = vmatmul.f32.gmra.mxu0 %v411
  %v470 = vpop.f32.mrf.mxu0
  %v471 = vadd.f32 %v374, %v470
  %472 = vmatmul.f32.gmra.mxu0 %v413
  %v473 = vpop.f32.mrf.mxu0
  %v474 = vadd.f32 %v377, %v473
  %475 = vmatmul.f32.gmra.mxu0 %v415
  %v476 = vpop.f32.mrf.mxu0
  %v477 = vadd.f32 %v380, %v476
  %478 = vmatmul.f32.gmra.mxu0 %v417
  %v479 = vpop.f32.mrf.mxu0
  %v480 = vadd.f32 %v383, %v479
  %481 = vmatmul.f32.gmra.mxu0 %v419
  %v482 = vpop.f32.mrf.mxu0
  %v483 = vadd.f32 %v386, %v482
  %484 = vmatmul.f32.gmra.mxu0 %v421
  %v485 = vpop.f32.mrf.mxu0
  %v486 = vadd.f32 %v389, %v485
  %487 = vdwg.mxu0
  %v488 = vld [vmem:[%s2 + $0x40] sm:$0xff]
  %v489 = vld [vmem:[%s2 + $0x48] sm:$0xff]
  %v490 = vld [vmem:[%s2 + $0x50] sm:$0xff]
  %v491 = vld [vmem:[%s2 + $0x58] sm:$0xff]
  %vm492 = vcmask 1045504
  %v493 = vrot.slane %v184, 2
  %v494 = vrot.slane %v187, 2
  %v495 = vsel %vm492, %v493, %v494
  %v496 = vrot.slane %v190, 2
  %v497 = vsel %vm492, %v494, %v496
  %v498 = vrot.slane %v193, 2
  %v499 = vsel %vm492, %v496, %v498
  %v500 = vrot.slane %v196, 2
  %v501 = vsel %vm492, %v498, %v500
  %v502 = vrot.slane %v199, 2
  %v503 = vsel %vm492, %v500, %v502
  %v504 = vrot.slane %v202, 2
  %v505 = vsel %vm492, %v502, %v504
  %v506 = vrot.slane %v205, 2
  %v507 = vsel %vm492, %v504, %v506
  %v508 = vrot.slane %v208, 2
  %v509 = vsel %vm492, %v506, %v508
  %v510 = vrot.slane %v211, 2
  %v511 = vsel %vm492, %v508, %v510
  %v512 = vrot.slane %v214, 2
  %v513 = vsel %vm492, %v510, %v512
  %v514 = vrot.slane %v217, 2
  %v515 = vsel %vm492, %v512, %v514
  %v516 = vrot.slane %v220, 2
  %v517 = vsel %vm492, %v514, %v516
  %v518 = vrot.slane %v223, 2
  %v519 = vsel %vm492, %v516, %v518
  %v520 = vrot.slane %v226, 2
  %v521 = vsel %vm492, %v518, %v520
  %v522 = vrot.slane %v229, 2
  %v523 = vsel %vm492, %v520, %v522
  %v524 = vrot.slane %v232, 2
  %v525 = vsel %vm492, %v522, %v524
  %v526 = vsel %vm293, %v495, 0
  %v528 = vsel %vm293, %v497, 0
  %v530 = vsel %vm293, %v499, 0
  %v532 = vsel %vm293, %v501, 0
  %v534 = vsel %vm293, %v503, 0
  %v536 = vsel %vm293, %v505, 0
  %v538 = vsel %vm293, %v507, 0
  %v540 = vsel %vm293, %v509, 0
  %v542 = vsel %vm293, %v511, 0
  %v544 = vsel %vm293, %v513, 0
  %v546 = vsel %vm293, %v515, 0
  %v548 = vsel %vm293, %v517, 0
  %v550 = vsel %vm293, %v519, 0
  %v552 = vsel %vm293, %v521, 0
  %v554 = vsel %vm293, %v523, 0
  %v556 = vsel %vm293, %v525, 0
  %558 = vmatpush.msra.mxu0 0.0
  %559 = vmatpush.msra.mxu0 0.0
  %560 = vmatpush.msra.mxu0 0.0
  %561 = vmatpush.msra.mxu0 0.0
  %562 = vmatpush.msra.mxu0 0.0
  %563 = vmatpush.msra.mxu0 0.0
  %564 = vmatpush.msra.mxu0 0.0
  %565 = vmatpush.msra.mxu0 0.0
  %566 = vmatpush.msra.mxu0 0.0
  %567 = vmatpush.msra.mxu0 0.0
  %568 = vmatpush.msra.mxu0 0.0
  %569 = vmatpush.msra.mxu0 0.0
  %570 = vmatpush.msra.mxu0 %v491
  %571 = vmatpush.msra.mxu0 %v490
  %572 = vmatpush.msra.mxu0 %v489
  %573 = vmatpush.msra.mxu0 %v488
  %574 = vmatmul.f32.gmra.mxu0 %v526
  %v575 = vpop.f32.mrf.mxu0
  %v576 = vadd.f32 0.0, %v575
  %577 = vmatmul.f32.gmra.mxu0 %v528
  %v578 = vpop.f32.mrf.mxu0
  %v579 = vadd.f32 0.0, %v578
  %580 = vmatmul.f32.gmra.mxu0 %v530
  %v581 = vpop.f32.mrf.mxu0
  %v582 = vadd.f32 0.0, %v581
  %583 = vmatmul.f32.gmra.mxu0 %v532
  %v584 = vpop.f32.mrf.mxu0
  %v585 = vadd.f32 0.0, %v584
  %586 = vmatmul.f32.gmra.mxu0 %v534
  %v587 = vpop.f32.mrf.mxu0
  %v588 = vadd.f32 0.0, %v587
  %589 = vmatmul.f32.gmra.mxu0 %v536
  %v590 = vpop.f32.mrf.mxu0
  %v591 = vadd.f32 0.0, %v590
  %592 = vmatmul.f32.gmra.mxu0 %v538
  %v593 = vpop.f32.mrf.mxu0
  %v594 = vadd.f32 0.0, %v593
  %595 = vmatmul.f32.gmra.mxu0 %v540
  %v596 = vpop.f32.mrf.mxu0
  %v597 = vadd.f32 0.0, %v596
  %598 = vmatmul.f32.gmra.mxu0 %v542
  %v599 = vpop.f32.mrf.mxu0
  %v600 = vadd.f32 0.0, %v599
  %601 = vmatmul.f32.gmra.mxu0 %v544
  %v602 = vpop.f32.mrf.mxu0
  %v603 = vadd.f32 0.0, %v602
  %604 = vmatmul.f32.gmra.mxu0 %v546
  %v605 = vpop.f32.mrf.mxu0
  %v606 = vadd.f32 0.0, %v605
  %607 = vmatmul.f32.gmra.mxu0 %v548
  %v608 = vpop.f32.mrf.mxu0
  %v609 = vadd.f32 0.0, %v608
  %610 = vmatmul.f32.gmra.mxu0 %v550
  %v611 = vpop.f32.mrf.mxu0
  %v612 = vadd.f32 0.0, %v611
  %613 = vmatmul.f32.gmra.mxu0 %v552
  %v614 = vpop.f32.mrf.mxu0
  %v615 = vadd.f32 0.0, %v614
  %616 = vmatmul.f32.gmra.mxu0 %v554
  %v617 = vpop.f32.mrf.mxu0
  %v618 = vadd.f32 0.0, %v617
  %619 = vmatmul.f32.gmra.mxu0 %v556
  %v620 = vpop.f32.mrf.mxu0
  %v621 = vadd.f32 0.0, %v620
  %622 = vdwg.mxu0
  %v623 = vadd.f32 %v441, %v576
  %v624 = vadd.f32 %v444, %v579
  %v625 = vadd.f32 %v447, %v582
  %v626 = vadd.f32 %v450, %v585
  %v627 = vadd.f32 %v453, %v588
  %v628 = vadd.f32 %v456, %v591
  %v629 = vadd.f32 %v459, %v594
  %v630 = vadd.f32 %v462, %v597
  %v631 = vadd.f32 %v465, %v600
  %v632 = vadd.f32 %v468, %v603
  %v633 = vadd.f32 %v471, %v606
  %v634 = vadd.f32 %v474, %v609
  %v635 = vadd.f32 %v477, %v612
  %v636 = vadd.f32 %v480, %v615
  %v637 = vadd.f32 %v483, %v618
  %v638 = vadd.f32 %v486, %v621
  %v639 = vld [vmem:[%s2 + $0x60] sm:$0xff]
  %v640 = vld [vmem:[%s2 + $0x68] sm:$0xff]
  %v641 = vld [vmem:[%s2 + $0x70] sm:$0xff]
  %v642 = vld [vmem:[%s2 + $0x78] sm:$0xff]
  %vm643 = vcmask 1044480
  %v644 = vrot.slane %v184, 3
  %v645 = vrot.slane %v187, 3
  %v646 = vsel %vm643, %v644, %v645
  %v647 = vrot.slane %v190, 3
  %v648 = vsel %vm643, %v645, %v647
  %v649 = vrot.slane %v193, 3
  %v650 = vsel %vm643, %v647, %v649
  %v651 = vrot.slane %v196, 3
  %v652 = vsel %vm643, %v649, %v651
  %v653 = vrot.slane %v199, 3
  %v654 = vsel %vm643, %v651, %v653
  %v655 = vrot.slane %v202, 3
  %v656 = vsel %vm643, %v653, %v655
  %v657 = vrot.slane %v205, 3
  %v658 = vsel %vm643, %v655, %v657
  %v659 = vrot.slane %v208, 3
  %v660 = vsel %vm643, %v657, %v659
  %v661 = vrot.slane %v211, 3
  %v662 = vsel %vm643, %v659, %v661
  %v663 = vrot.slane %v214, 3
  %v664 = vsel %vm643, %v661, %v663
  %v665 = vrot.slane %v217, 3
  %v666 = vsel %vm643, %v663, %v665
  %v667 = vrot.slane %v220, 3
  %v668 = vsel %vm643, %v665, %v667
  %v669 = vrot.slane %v223, 3
  %v670 = vsel %vm643, %v667, %v669
  %v671 = vrot.slane %v226, 3
  %v672 = vsel %vm643, %v669, %v671
  %v673 = vrot.slane %v229, 3
  %v674 = vsel %vm643, %v671, %v673
  %v675 = vrot.slane %v232, 3
  %v676 = vsel %vm643, %v673, %v675
  %v677 = vsel %vm293, %v646, 0
  %v679 = vsel %vm293, %v648, 0
  %v681 = vsel %vm293, %v650, 0
  %v683 = vsel %vm293, %v652, 0
  %v685 = vsel %vm293, %v654, 0
  %v687 = vsel %vm293, %v656, 0
  %v689 = vsel %vm293, %v658, 0
  %v691 = vsel %vm293, %v660, 0
  %v693 = vsel %vm293, %v662, 0
  %v695 = vsel %vm293, %v664, 0
  %v697 = vsel %vm293, %v666, 0
  %v699 = vsel %vm293, %v668, 0
  %v701 = vsel %vm293, %v670, 0
  %v703 = vsel %vm293, %v672, 0
  %v705 = vsel %vm293, %v674, 0
  %v707 = vsel %vm293, %v676, 0
  %709 = vmatpush.msra.mxu0 0.0
  %710 = vmatpush.msra.mxu0 0.0
  %711 = vmatpush.msra.mxu0 0.0
  %712 = vmatpush.msra.mxu0 0.0
  %713 = vmatpush.msra.mxu0 0.0
  %714 = vmatpush.msra.mxu0 0.0
  %715 = vmatpush.msra.mxu0 0.0
  %716 = vmatpush.msra.mxu0 0.0
  %717 = vmatpush.msra.mxu0 0.0
  %718 = vmatpush.msra.mxu0 0.0
  %719 = vmatpush.msra.mxu0 0.0
  %720 = vmatpush.msra.mxu0 0.0
  %721 = vmatpush.msra.mxu0 %v642
  %722 = vmatpush.msra.mxu0 %v641
  %723 = vmatpush.msra.mxu0 %v640
  %724 = vmatpush.msra.mxu0 %v639
  %725 = vmatmul.f32.gmra.mxu0 %v677
  %v726 = vpop.f32.mrf.mxu0
  %v727 = vadd.f32 0.0, %v726
  %728 = vmatmul.f32.gmra.mxu0 %v679
  %v729 = vpop.f32.mrf.mxu0
  %v730 = vadd.f32 0.0, %v729
  %731 = vmatmul.f32.gmra.mxu0 %v681
  %v732 = vpop.f32.mrf.mxu0
  %v733 = vadd.f32 0.0, %v732
  %734 = vmatmul.f32.gmra.mxu0 %v683
  %v735 = vpop.f32.mrf.mxu0
  %v736 = vadd.f32 0.0, %v735
  %737 = vmatmul.f32.gmra.mxu0 %v685
  %v738 = vpop.f32.mrf.mxu0
  %v739 = vadd.f32 0.0, %v738
  %740 = vmatmul.f32.gmra.mxu0 %v687
  %v741 = vpop.f32.mrf.mxu0
  %v742 = vadd.f32 0.0, %v741
  %743 = vmatmul.f32.gmra.mxu0 %v689
  %v744 = vpop.f32.mrf.mxu0
  %v745 = vadd.f32 0.0, %v744
  %746 = vmatmul.f32.gmra.mxu0 %v691
  %v747 = vpop.f32.mrf.mxu0
  %v748 = vadd.f32 0.0, %v747
  %749 = vmatmul.f32.gmra.mxu0 %v693
  %v750 = vpop.f32.mrf.mxu0
  %v751 = vadd.f32 0.0, %v750
  %752 = vmatmul.f32.gmra.mxu0 %v695
  %v753 = vpop.f32.mrf.mxu0
  %v754 = vadd.f32 0.0, %v753
  %755 = vmatmul.f32.gmra.mxu0 %v697
  %v756 = vpop.f32.mrf.mxu0
  %v757 = vadd.f32 0.0, %v756
  %758 = vmatmul.f32.gmra.mxu0 %v699
  %v759 = vpop.f32.mrf.mxu0
  %v760 = vadd.f32 0.0, %v759
  %761 = vmatmul.f32.gmra.mxu0 %v701
  %v762 = vpop.f32.mrf.mxu0
  %v763 = vadd.f32 0.0, %v762
  %764 = vmatmul.f32.gmra.mxu0 %v703
  %v765 = vpop.f32.mrf.mxu0
  %v766 = vadd.f32 0.0, %v765
  %767 = vmatmul.f32.gmra.mxu0 %v705
  %v768 = vpop.f32.mrf.mxu0
  %v769 = vadd.f32 0.0, %v768
  %770 = vmatmul.f32.gmra.mxu0 %v707
  %v771 = vpop.f32.mrf.mxu0
  %v772 = vadd.f32 0.0, %v771
  %773 = vdwg.mxu0
  %v774 = vadd.f32 %v623, %v727
  %v775 = vadd.f32 %v624, %v730
  %v776 = vadd.f32 %v625, %v733
  %v777 = vadd.f32 %v626, %v736
  %v778 = vadd.f32 %v627, %v739
  %v779 = vadd.f32 %v628, %v742
  %v780 = vadd.f32 %v629, %v745
  %v781 = vadd.f32 %v630, %v748
  %v782 = vadd.f32 %v631, %v751
  %v783 = vadd.f32 %v632, %v754
  %v784 = vadd.f32 %v633, %v757
  %v785 = vadd.f32 %v634, %v760
  %v786 = vadd.f32 %v635, %v763
  %v787 = vadd.f32 %v636, %v766
  %v788 = vadd.f32 %v637, %v769
  %v789 = vadd.f32 %v638, %v772
  %v790 = vld [vmem:[%s2 + $0x80] sm:$0xff]
  %v791 = vld [vmem:[%s2 + $0x88] sm:$0xff]
  %v792 = vld [vmem:[%s2 + $0x90] sm:$0xff]
  %v793 = vld [vmem:[%s2 + $0x98] sm:$0xff]
  %vm794 = vcmask 1043456
  %v795 = vrot.slane %v184, 4
  %v796 = vrot.slane %v187, 4
  %v797 = vsel %vm794, %v795, %v796
  %v798 = vrot.slane %v190, 4
  %v799 = vsel %vm794, %v796, %v798
  %v800 = vrot.slane %v193, 4
  %v801 = vsel %vm794, %v798, %v800
  %v802 = vrot.slane %v196, 4
  %v803 = vsel %vm794, %v800, %v802
  %v804 = vrot.slane %v199, 4
  %v805 = vsel %vm794, %v802, %v804
  %v806 = vrot.slane %v202, 4
  %v807 = vsel %vm794, %v804, %v806
  %v808 = vrot.slane %v205, 4
  %v809 = vsel %vm794, %v806, %v808
  %v810 = vrot.slane %v208, 4
  %v811 = vsel %vm794, %v808, %v810
  %v812 = vrot.slane %v211, 4
  %v813 = vsel %vm794, %v810, %v812
  %v814 = vrot.slane %v214, 4
  %v815 = vsel %vm794, %v812, %v814
  %v816 = vrot.slane %v217, 4
  %v817 = vsel %vm794, %v814, %v816
  %v818 = vrot.slane %v220, 4
  %v819 = vsel %vm794, %v816, %v818
  %v820 = vrot.slane %v223, 4
  %v821 = vsel %vm794, %v818, %v820
  %v822 = vrot.slane %v226, 4
  %v823 = vsel %vm794, %v820, %v822
  %v824 = vrot.slane %v229, 4
  %v825 = vsel %vm794, %v822, %v824
  %v826 = vrot.slane %v232, 4
  %v827 = vsel %vm794, %v824, %v826
  %v828 = vsel %vm293, %v797, 0
  %v830 = vsel %vm293, %v799, 0
  %v832 = vsel %vm293, %v801, 0
  %v834 = vsel %vm293, %v803, 0
  %v836 = vsel %vm293, %v805, 0
  %v838 = vsel %vm293, %v807, 0
  %v840 = vsel %vm293, %v809, 0
  %v842 = vsel %vm293, %v811, 0
  %v844 = vsel %vm293, %v813, 0
  %v846 = vsel %vm293, %v815, 0
  %v848 = vsel %vm293, %v817, 0
  %v850 = vsel %vm293, %v819, 0
  %v852 = vsel %vm293, %v821, 0
  %v854 = vsel %vm293, %v823, 0
  %v856 = vsel %vm293, %v825, 0
  %v858 = vsel %vm293, %v827, 0
  %860 = vmatpush.msra.mxu0 0.0
  %861 = vmatpush.msra.mxu0 0.0
  %862 = vmatpush.msra.mxu0 0.0
  %863 = vmatpush.msra.mxu0 0.0
  %864 = vmatpush.msra.mxu0 0.0
  %865 = vmatpush.msra.mxu0 0.0
  %866 = vmatpush.msra.mxu0 0.0
  %867 = vmatpush.msra.mxu0 0.0
  %868 = vmatpush.msra.mxu0 0.0
  %869 = vmatpush.msra.mxu0 0.0
  %870 = vmatpush.msra.mxu0 0.0
  %871 = vmatpush.msra.mxu0 0.0
  %872 = vmatpush.msra.mxu0 %v793
  %873 = vmatpush.msra.mxu0 %v792
  %874 = vmatpush.msra.mxu0 %v791
  %875 = vmatpush.msra.mxu0 %v790
  %876 = vmatmul.f32.gmra.mxu0 %v828
  %v877 = vpop.f32.mrf.mxu0
  %v878 = vadd.f32 0.0, %v877
  %879 = vmatmul.f32.gmra.mxu0 %v830
  %v880 = vpop.f32.mrf.mxu0
  %v881 = vadd.f32 0.0, %v880
  %882 = vmatmul.f32.gmra.mxu0 %v832
  %v883 = vpop.f32.mrf.mxu0
  %v884 = vadd.f32 0.0, %v883
  %885 = vmatmul.f32.gmra.mxu0 %v834
  %v886 = vpop.f32.mrf.mxu0
  %v887 = vadd.f32 0.0, %v886
  %888 = vmatmul.f32.gmra.mxu0 %v836
  %v889 = vpop.f32.mrf.mxu0
  %v890 = vadd.f32 0.0, %v889
  %891 = vmatmul.f32.gmra.mxu0 %v838
  %v892 = vpop.f32.mrf.mxu0
  %v893 = vadd.f32 0.0, %v892
  %894 = vmatmul.f32.gmra.mxu0 %v840
  %v895 = vpop.f32.mrf.mxu0
  %v896 = vadd.f32 0.0, %v895
  %897 = vmatmul.f32.gmra.mxu0 %v842
  %v898 = vpop.f32.mrf.mxu0
  %v899 = vadd.f32 0.0, %v898
  %900 = vmatmul.f32.gmra.mxu0 %v844
  %v901 = vpop.f32.mrf.mxu0
  %v902 = vadd.f32 0.0, %v901
  %903 = vmatmul.f32.gmra.mxu0 %v846
  %v904 = vpop.f32.mrf.mxu0
  %v905 = vadd.f32 0.0, %v904
  %906 = vmatmul.f32.gmra.mxu0 %v848
  %v907 = vpop.f32.mrf.mxu0
  %v908 = vadd.f32 0.0, %v907
  %909 = vmatmul.f32.gmra.mxu0 %v850
  %v910 = vpop.f32.mrf.mxu0
  %v911 = vadd.f32 0.0, %v910
  %912 = vmatmul.f32.gmra.mxu0 %v852
  %v913 = vpop.f32.mrf.mxu0
  %v914 = vadd.f32 0.0, %v913
  %915 = vmatmul.f32.gmra.mxu0 %v854
  %v916 = vpop.f32.mrf.mxu0
  %v917 = vadd.f32 0.0, %v916
  %918 = vmatmul.f32.gmra.mxu0 %v856
  %v919 = vpop.f32.mrf.mxu0
  %v920 = vadd.f32 0.0, %v919
  %921 = vmatmul.f32.gmra.mxu0 %v858
  %v922 = vpop.f32.mrf.mxu0
  %v923 = vadd.f32 0.0, %v922
  %924 = vdwg.mxu0
  %v925 = vadd.f32 %v774, %v878
  %v926 = vadd.f32 %v775, %v881
  %v927 = vadd.f32 %v776, %v884
  %v928 = vadd.f32 %v777, %v887
  %v929 = vadd.f32 %v778, %v890
  %v930 = vadd.f32 %v779, %v893
  %v931 = vadd.f32 %v780, %v896
  %v932 = vadd.f32 %v781, %v899
  %v933 = vadd.f32 %v782, %v902
  %v934 = vadd.f32 %v783, %v905
  %v935 = vadd.f32 %v784, %v908
  %v936 = vadd.f32 %v785, %v911
  %v937 = vadd.f32 %v786, %v914
  %v938 = vadd.f32 %v787, %v917
  %v939 = vadd.f32 %v788, %v920
  %v940 = vadd.f32 %v789, %v923
  %v941 = vld [vmem:[%s3] sm:$0x1]
  %v943 = vperm.slane %v941, 0
  %v945 = vmul.f32 %v925, %v943
  %v946 = vmul.f32 %v926, %v943
  %v947 = vmul.f32 %v927, %v943
  %v948 = vmul.f32 %v928, %v943
  %v949 = vmul.f32 %v929, %v943
  %v950 = vmul.f32 %v930, %v943
  %v951 = vmul.f32 %v931, %v943
  %v952 = vmul.f32 %v932, %v943
  %v953 = vmul.f32 %v933, %v943
  %v954 = vmul.f32 %v934, %v943
  %v955 = vmul.f32 %v935, %v943
  %v956 = vmul.f32 %v936, %v943
  %v957 = vmul.f32 %v937, %v943
  %v958 = vmul.f32 %v938, %v943
  %v959 = vmul.f32 %v939, %v943
  %v960 = vmul.f32 %v940, %v943
  %v961 = vld [vmem:[%s4] sm:$0x1]
  %v963 = vperm.slane %v961, 0
  %v965 = vadd.f32 %v945, %v963
  %v966 = vadd.f32 %v946, %v963
  %v967 = vadd.f32 %v947, %v963
  %v968 = vadd.f32 %v948, %v963
  %v969 = vadd.f32 %v949, %v963
  %v970 = vadd.f32 %v950, %v963
  %v971 = vadd.f32 %v951, %v963
  %v972 = vadd.f32 %v952, %v963
  %v973 = vadd.f32 %v953, %v963
  %v974 = vadd.f32 %v954, %v963
  %v975 = vadd.f32 %v955, %v963
  %v976 = vadd.f32 %v956, %v963
  %v977 = vadd.f32 %v957, %v963
  %v978 = vadd.f32 %v958, %v963
  %v979 = vadd.f32 %v959, %v963
  %v980 = vadd.f32 %v960, %v963
  %v981 = vmax.f32 %v965, 0.0
  %v982 = vmax.f32 %v966, 0.0
  %v983 = vmax.f32 %v967, 0.0
  %v984 = vmax.f32 %v968, 0.0
  %v985 = vmax.f32 %v969, 0.0
  %v986 = vmax.f32 %v970, 0.0
  %v987 = vmax.f32 %v971, 0.0
  %v988 = vmax.f32 %v972, 0.0
  %v989 = vmax.f32 %v973, 0.0
  %v990 = vmax.f32 %v974, 0.0
  %v991 = vmax.f32 %v975, 0.0
  %v992 = vmax.f32 %v976, 0.0
  %v993 = vmax.f32 %v977, 0.0
  %v994 = vmax.f32 %v978, 0.0
  %v995 = vmax.f32 %v979, 0.0
  %v996 = vmax.f32 %v980, 0.0
  %v997 = vld [vmem:[%s5] sm:$0xff]
  %v998 = vld [vmem:[%s5 + $0x8] sm:$0xff]
  %v999 = vmul.f32 %v981, %v997
  %v1000 = vmul.f32 %v982, %v998
  %v1001 = vmul.f32 %v983, %v997
  %v1002 = vmul.f32 %v984, %v998
  %v1003 = vmul.f32 %v985, %v997
  %v1004 = vmul.f32 %v986, %v998
  %v1005 = vmul.f32 %v987, %v997
  %v1006 = vmul.f32 %v988, %v998
  %v1007 = vmul.f32 %v989, %v997
  %v1008 = vmul.f32 %v990, %v998
  %v1009 = vmul.f32 %v991, %v997
  %v1010 = vmul.f32 %v992, %v998
  %v1011 = vmul.f32 %v993, %v997
  %v1012 = vmul.f32 %v994, %v998
  %v1013 = vmul.f32 %v995, %v997
  %v1014 = vmul.f32 %v996, %v998
  %v1015 = vmax.f32 %v999, %v1000
  %v1016 = vrot.slane %v1015, 4
  %v1017 = vmax.f32 %v1015, %v1016
  %v1018 = vrot.slane %v1017, 2
  %v1019 = vmax.f32 %v1017, %v1018
  %v1020 = vrot.slane %v1019, 1
  %v1021 = vmax.f32 %v1019, %v1020
  %v1022 = vmax.f32 %v1001, %v1002
  %v1023 = vrot.slane %v1022, 4
  %v1024 = vmax.f32 %v1022, %v1023
  %v1025 = vrot.slane %v1024, 2
  %v1026 = vmax.f32 %v1024, %v1025
  %v1027 = vrot.slane %v1026, 1
  %v1028 = vmax.f32 %v1026, %v1027
  %v1029 = vmax.f32 %v1003, %v1004
  %v1030 = vrot.slane %v1029, 4
  %v1031 = vmax.f32 %v1029, %v1030
  %v1032 = vrot.slane %v1031, 2
  %v1033 = vmax.f32 %v1031, %v1032
  %v1034 = vrot.slane %v1033, 1
  %v1035 = vmax.f32 %v1033, %v1034
  %v1036 = vmax.f32 %v1005, %v1006
  %v1037 = vrot.slane %v1036, 4
  %v1038 = vmax.f32 %v1036, %v1037
  %v1039 = vrot.slane %v1038, 2
  %v1040 = vmax.f32 %v1038, %v1039
  %v1041 = vrot.slane %v1040, 1
  %v1042 = vmax.f32 %v1040, %v1041
  %v1043 = vmax.f32 %v1007, %v1008
  %v1044 = vrot.slane %v1043, 4
  %v1045 = vmax.f32 %v1043, %v1044
  %v1046 = vrot.slane %v1045, 2
  %v1047 = vmax.f32 %v1045, %v1046
  %v1048 = vrot.slane %v1047, 1
  %v1049 = vmax.f32 %v1047, %v1048
  %v1050 = vmax.f32 %v1009, %v1010
  %v1051 = vrot.slane %v1050, 4
  %v1052 = vmax.f32 %v1050, %v1051
  %v1053 = vrot.slane %v1052, 2
  %v1054 = vmax.f32 %v1052, %v1053
  %v1055 = vrot.slane %v1054, 1
  %v1056 = vmax.f32 %v1054, %v1055
  %v1057 = vmax.f32 %v1011, %v1012
  %v1058 = vrot.slane %v1057, 4
  %v1059 = vmax.f32 %v1057, %v1058
  %v1060 = vrot.slane %v1059, 2
  %v1061 = vmax.f32 %v1059, %v1060
  %v1062 = vrot.slane %v1061, 1
  %v1063 = vmax.f32 %v1061, %v1062
  %v1064 = vmax.f32 %v1013, %v1014
  %v1065 = vrot.slane %v1064, 4
  %v1066 = vmax.f32 %v1064, %v1065
  %v1067 = vrot.slane %v1066, 2
  %v1068 = vmax.f32 %v1066, %v1067
  %v1069 = vrot.slane %v1068, 1
  %v1070 = vmax.f32 %v1068, %v1069
  %v1071 = vld [vmem:[%s6] sm:$0xff]
  %v1072 = vld [vmem:[%s6 + $0x8] sm:$0xff]
  %v1073 = vld [vmem:[%s6 + $0x10] sm:$0xff]
  %v1074 = vld [vmem:[%s6 + $0x18] sm:$0xff]
  %v1075 = vld [vmem:[%s6 + $0x20] sm:$0xff]
  %v1076 = vld [vmem:[%s6 + $0x28] sm:$0xff]
  %v1077 = vld [vmem:[%s6 + $0x30] sm:$0xff]
  %v1078 = vld [vmem:[%s6 + $0x38] sm:$0xff]
  %v1079 = vld [vmem:[%s6 + $0x40] sm:$0xff]
  %v1080 = vld [vmem:[%s6 + $0x48] sm:$0xff]
  %v1081 = vld [vmem:[%s6 + $0x50] sm:$0xff]
  %v1082 = vld [vmem:[%s6 + $0x58] sm:$0xff]
  %v1083 = vld [vmem:[%s6 + $0x60] sm:$0xff]
  %v1084 = vld [vmem:[%s6 + $0x68] sm:$0xff]
  %v1085 = vld [vmem:[%s6 + $0x70] sm:$0xff]
  %v1086 = vld [vmem:[%s6 + $0x78] sm:$0xff]
  %v1087 = vld [vmem:[%s7] sm:$0x1]
  %v1089 = vperm.slane %v1087, 0
  %vm1099 = vcmask 1041409
  %v1100 = vsel %vm1099, %v1028, %v1021
  %vm1101 = vcmask 1042434
  %v1102 = vsel %vm1101, %v1035, %v1100
  %vm1103 = vcmask 1043459
  %v1104 = vsel %vm1103, %v1042, %v1102
  %vm1105 = vcmask 1044484
  %v1106 = vsel %vm1105, %v1049, %v1104
  %vm1107 = vcmask 1045509
  %v1108 = vsel %vm1107, %v1056, %v1106
  %vm1109 = vcmask 1046534
  %v1110 = vsel %vm1109, %v1063, %v1108
  %vm1111 = vcmask 1047559
  %v1112 = vsel %vm1111, %v1070, %v1110
  %1114 = vmatpush.msra.mxu0 %v1086
  %1115 = vmatpush.msra.mxu0 %v1085
  %1116 = vmatpush.msra.mxu0 %v1084
  %1117 = vmatpush.msra.mxu0 %v1083
  %1118 = vmatpush.msra.mxu0 %v1082
  %1119 = vmatpush.msra.mxu0 %v1081
  %1120 = vmatpush.msra.mxu0 %v1080
  %1121 = vmatpush.msra.mxu0 %v1079
  %1122 = vmatpush.msra.mxu0 %v1078
  %1123 = vmatpush.msra.mxu0 %v1077
  %1124 = vmatpush.msra.mxu0 %v1076
  %1125 = vmatpush.msra.mxu0 %v1075
  %1126 = vmatpush.msra.mxu0 %v1074
  %1127 = vmatpush.msra.mxu0 %v1073
  %1128 = vmatpush.msra.mxu0 %v1072
  %1129 = vmatpush.msra.mxu0 %v1071
  %1130 = vmatmul.f32.gmra.mxu0 %v1112
  %v1131 = vpop.f32.mrf.mxu0
  %v1132 = vadd.f32 %v1089, %v1131
  %1133 = vdwg.mxu0
  %1134 = vmax.xlane.f32.xlu0 %v1132
  %v1135 = vpop.xlane.xlu0 %1134
  %v1136 = vsub.f32 %v1132, %v1135
  %v1137 = vmul.f32 %v1136, 1.442695
  %v1138 = vpow.pop %v1137
  %1139 = vadd.xlane.f32.xlu0 %v1138
  %v1140 = vpop.xlane.xlu0 %1139
  %v1141 = vrcp.pop %v1140
  %v1142 = vmul.f32 %v1138, %v1141
  %1143 = vst [vmem:[%s8] sm:$0xff] %v1142
  // Predicated region
  $region34: #{textcnn_forward.1} parent=0 // pred_check
    _
  $region35: #{textcnn_forward.1} parent=0 // pred_check_branch
    %1145 = sbr.rel (0) target = $region37
  $region36: #{textcnn_forward.1} parent=0 // pred_region
    _
  $region37: #{textcnn_forward.1} parent=0 // pred_fallthru
    _
  // Predicated region
  $region38: #{textcnn_forward.1} parent=0 // pred_check
    _
  $region39: #{textcnn_forward.1} parent=0 // pred_check_branch
    %1147 = sbr.rel (0) target = $region41
  $region40: #{textcnn_forward.1} parent=0 // pred_region
    _
  $region41: #{textcnn_forward.1} parent=0 // pred_fallthru
    _

</llo_original>
